<compile_context>
chip_gen: v7x
topology: tpu7x:2x2x1
jax: 0.10.0
libtpu: 0.0.40
codegen_flags: <defaults>
</compile_context>

<pallas_src>
import jax
import jax.numpy as jnp
from jax.experimental import pallas as pl
from jax.experimental.pallas import tpu as pltpu

_COL2_SCALE = 11.0 * (10.0 ** 0.5)  # folded: tanh(x) * 11 * sqrt(10)


def mse_loss(outputs, labels, *, max_block_bytes=2 * 1024 * 1024,
             max_tile_rows=4096):
    """Pallas TPU implementation of the custom MSELoss.forward (loss value)."""
    assert outputs.shape == labels.shape
    assert outputs.ndim == 2 and outputs.shape[1] > 2
    N, F = outputs.shape

    # --- tile sizing ---------------------------------------------------------
    # Rows per tile: multiple of 8 (sublane), sized so one input block stays a
    # few MiB (2 inputs x 2 pipeline buffers fits comfortably under the scoped
    # VMEM limit on every generation, including v7x's smaller 64 MiB VMEM).
    rows_budget = max(8, (max_block_bytes // (F * 4)) // 8 * 8)
    n_rounded = int(pl.cdiv(N, 8)) * 8
    tile_n = int(min(rows_budget, max_tile_rows, n_rounded))
    tile_n = max(8, (tile_n // 8) * 8)

    total_tiles = int(pl.cdiv(N, tile_n))
    num_parts = 2 if total_tiles >= 2 else 1          # v7x: one per TensorCore
    tiles_per_part = int(pl.cdiv(total_tiles, num_parts))
    last_block = total_tiles - 1

    def in_index(p, i):
        # Clamp so overhanging grid slots never DMA out of bounds; their
        # contribution is zeroed by the row mask inside the kernel.
        b = p * tiles_per_part + i
        return (jnp.minimum(b, last_block), 0)

    def kernel(o_ref, l_ref, acc_ref):
        p = pl.program_id(0)
        i = pl.program_id(1)

        @pl.when(i == 0)
        def _():
            acc_ref[...] = jnp.zeros_like(acc_ref)

        o = o_ref[...].astype(jnp.float32)
        l = l_ref[...].astype(jnp.float32)

        d = o - l
        sq = d * d                                     # (tile_n, F), plain cols

        # Column-2 transform on the narrow slice only (EUP work = tile_n elems).
        dt = jnp.tanh(o[:, 2:3]) * _COL2_SCALE - jnp.tanh(l[:, 2:3]) * _COL2_SCALE
        sq2 = dt * dt                                  # (tile_n, 1)

        col = jax.lax.broadcasted_iota(jnp.int32, sq.shape, 1)
        contrib = jnp.where(col == 2, sq2, sq)         # broadcast sq2 over lanes

        # Mask rows past the true batch size (ragged last tile / spare slots).
        row0 = (p * tiles_per_part + i) * tile_n
        rows = jax.lax.broadcasted_iota(jnp.int32, (tile_n, 1), 0) + row0
        contrib = jnp.where(rows < N, contrib, 0.0)

        acc_ref[...] += contrib[None, :, :]

    partial = pl.pallas_call(
        kernel,
        out_shape=jax.ShapeDtypeStruct((num_parts, tile_n, F), jnp.float32),
        grid_spec=pltpu.PrefetchScalarGridSpec(
            num_scalar_prefetch=0,
            grid=(num_parts, tiles_per_part),
            in_specs=[
                pl.BlockSpec((tile_n, F), in_index),
                pl.BlockSpec((tile_n, F), in_index),
            ],
            out_specs=pl.BlockSpec((1, tile_n, F), lambda p, i: (p, 0, 0)),
        ),
        compiler_params=pltpu.CompilerParams(
            dimension_semantics=("parallel", "arbitrary"),
            vmem_limit_bytes=32 * 1024 * 1024,
        ),
    )(outputs, labels)

    # Single small cross-lane reduction + global normalization in the wrapper.
    return jnp.sum(partial) / N


def _reference(outputs, labels):
    o = outputs.astype(jnp.float32)
    l = labels.astype(jnp.float32)
    o = o.at[:, 2].set(jnp.tanh(o[:, 2]) * 11.0 * (10.0 ** 0.5))
    l = l.at[:, 2].set(jnp.tanh(l[:, 2]) * 11.0 * (10.0 ** 0.5))
    return jnp.sum((o - l) ** 2, axis=(0, 1)) / o.shape[0]


if __name__ == "__main__":
    key = jax.random.PRNGKey(0)
    k1, k2 = jax.random.split(key)

    # Small shapes consistent with the module (batch=8, features=32, col 2 used).
    N, F = 8, 32
    outputs = jax.random.normal(k1, (N, F), dtype=jnp.float32)
    labels = jax.random.normal(k2, (N, F), dtype=jnp.float32)

    got = jax.block_until_ready(mse_loss(outputs, labels))
    want = jax.block_until_ready(_reference(outputs, labels))
    assert jnp.allclose(got, want, rtol=1e-5, atol=1e-4), (got, want)

    # Exercise the tiled / 2-partition / ragged-N path (still small shapes).
    N2, F2 = 300, 32
    o2 = jax.random.normal(jax.random.PRNGKey(1), (N2, F2), dtype=jnp.float32)
    l2 = jax.random.normal(jax.random.PRNGKey(2), (N2, F2), dtype=jnp.float32)
    got2 = jax.block_until_ready(mse_loss(o2, l2, max_tile_rows=64))
    want2 = jax.block_until_ready(_reference(o2, l2))
    assert jnp.allclose(got2, want2, rtol=1e-5, atol=1e-4), (got2, want2)

    print("KERNEL_OK")
</pallas_src>

<mosaic_0001>
module attributes {stable_mosaic.version = 11 : i64} {
  func.func @kernel(%arg0: i32, %arg1: i32, %arg2: memref<8x32xf32, #tpu.memory_space<vmem>>, %arg3: memref<8x32xf32, #tpu.memory_space<vmem>>, %arg4: memref<1x8x32xf32, #tpu.memory_space<vmem>>) attributes {dimension_semantics = [#tpu.dimension_semantics<parallel>, #tpu.dimension_semantics<arbitrary>], iteration_bounds = array<i64: 1, 1>, scalar_prefetch = 0 : i64, scratch_operands = 0 : i64, tpu.core_type = #tpu.core_type<tc>, window_params = [{transform_indices = @transform_0, window_bounds = array<i64: 8, 32>}, {transform_indices = @transform_1, window_bounds = array<i64: 8, 32>}, {transform_indices = @transform_2, window_bounds = array<i64: 1, 8, 32>}]} {
    %c0_i32 = arith.constant 0 : i32
    %0 = arith.cmpi eq, %arg1, %c0_i32 : i32
    %1 = arith.extui %0 : i1 to i32
    %c0_i32_0 = arith.constant 0 : i32
    %2 = arith.cmpi ne, %1, %c0_i32_0 : i32
    scf.if %2 {
      %cst_13 = arith.constant 0.000000e+00 : f32
      %39 = vector.broadcast %cst_13 : f32 to vector<1x8x32xf32>
      %c0_14 = arith.constant 0 : index
      %c0_15 = arith.constant 0 : index
      %c0_16 = arith.constant 0 : index
      %40 = vector.load %arg4[%c0_14, %c0_15, %c0_16] : memref<1x8x32xf32, #tpu.memory_space<vmem>>, vector<1x8x32xf32>
      tpu.vector_store %arg4[%c0_14, %c0_15, %c0_16], %39 {strides = array<i32>} : memref<1x8x32xf32, #tpu.memory_space<vmem>>, vector<1x8x32xf32>,
    } else {
    }
    %c0 = arith.constant 0 : index
    %c0_1 = arith.constant 0 : index
    %3 = vector.load %arg2[%c0, %c0_1] : memref<8x32xf32, #tpu.memory_space<vmem>>, vector<8x32xf32>
    %c0_2 = arith.constant 0 : index
    %c0_3 = arith.constant 0 : index
    %4 = vector.load %arg3[%c0_2, %c0_3] : memref<8x32xf32, #tpu.memory_space<vmem>>, vector<8x32xf32>
    %5 = arith.subf %3, %4 : vector<8x32xf32>
    %6 = arith.mulf %5, %5 : vector<8x32xf32>
    %7 = vector.extract_strided_slice %3 {offsets = [0, 2], sizes = [8, 1], strides = [1, 1]} : vector<8x32xf32> to vector<8x1xf32>
    %8 = math.tanh %7 : vector<8x1xf32>
    %cst = arith.constant 34.7850533 : f32
    %9 = vector.broadcast %cst : f32 to vector<8x1xf32>
    %10 = arith.mulf %8, %9 : vector<8x1xf32>
    %11 = vector.extract_strided_slice %4 {offsets = [0, 2], sizes = [8, 1], strides = [1, 1]} : vector<8x32xf32> to vector<8x1xf32>
    %12 = math.tanh %11 : vector<8x1xf32>
    %cst_4 = arith.constant 34.7850533 : f32
    %13 = vector.broadcast %cst_4 : f32 to vector<8x1xf32>
    %14 = arith.mulf %12, %13 : vector<8x1xf32>
    %15 = arith.subf %10, %14 : vector<8x1xf32>
    %16 = arith.mulf %15, %15 : vector<8x1xf32>
    %17 = tpu.iota {dimensions = array<i32: 1>} : vector<8x32xi32>
    %c2_i32 = arith.constant 2 : i32
    %18 = vector.broadcast %c2_i32 : i32 to vector<8x32xi32>
    %19 = arith.cmpi eq, %17, %18 : vector<8x32xi32>
    %20 = vector.shape_cast %16 : vector<8x1xf32> to vector<8x1xf32>
    %21 = vector.broadcast %20 : vector<8x1xf32> to vector<8x32xf32>
    %22 = arith.select %19, %21, %6 : vector<8x32xi1>, vector<8x32xf32>
    %c1_i32 = arith.constant 1 : i32
    %23 = arith.muli %arg0, %c1_i32 : i32
    %24 = arith.addi %23, %arg1 : i32
    %c8_i32 = arith.constant 8 : i32
    %25 = arith.muli %24, %c8_i32 : i32
    %26 = tpu.iota {dimensions = array<i32: 0>} : vector<8x1xi32>
    %27 = vector.broadcast %25 : i32 to vector<8x1xi32>
    %28 = arith.addi %26, %27 : vector<8x1xi32>
    %c8_i32_5 = arith.constant 8 : i32
    %29 = vector.broadcast %c8_i32_5 : i32 to vector<8x1xi32>
    %30 = arith.cmpi slt, %28, %29 : vector<8x1xi32>
    %cst_6 = arith.constant 0.000000e+00 : f32
    %31 = vector.shape_cast %30 : vector<8x1xi1> to vector<8x1xi1>
    %32 = vector.broadcast %31 : vector<8x1xi1> to vector<8x32xi1>
    %33 = vector.broadcast %cst_6 : f32 to vector<8x32xf32>
    %34 = arith.select %32, %22, %33 : vector<8x32xi1>, vector<8x32xf32>
    %c0_7 = arith.constant 0 : index
    %c0_8 = arith.constant 0 : index
    %c0_9 = arith.constant 0 : index
    %35 = vector.load %arg4[%c0_7, %c0_8, %c0_9] : memref<1x8x32xf32, #tpu.memory_space<vmem>>, vector<1x8x32xf32>
    %36 = vector.shape_cast %34 : vector<8x32xf32> to vector<1x8x32xf32>
    %37 = arith.addf %35, %36 : vector<1x8x32xf32>
    %c0_10 = arith.constant 0 : index
    %c0_11 = arith.constant 0 : index
    %c0_12 = arith.constant 0 : index
    %38 = vector.load %arg4[%c0_10, %c0_11, %c0_12] : memref<1x8x32xf32, #tpu.memory_space<vmem>>, vector<1x8x32xf32>
    tpu.vector_store %arg4[%c0_10, %c0_11, %c0_12], %37 {strides = array<i32>} : memref<1x8x32xf32, #tpu.memory_space<vmem>>, vector<1x8x32xf32>,
    return
  }
  func.func @transform_0(%arg0: i32, %arg1: i32) -> (i32, i32) {
    %c1_i32 = arith.constant 1 : i32
    %0 = arith.muli %arg0, %c1_i32 : i32
    %1 = arith.addi %0, %arg1 : i32
    %c0_i32 = arith.constant 0 : i32
    %2 = arith.minsi %1, %c0_i32 : i32
    %c0_i32_0 = arith.constant 0 : i32
    %c0_i32_1 = arith.constant 0 : i32
    return %2, %c0_i32_0 : i32, i32
  }
  func.func @transform_1(%arg0: i32, %arg1: i32) -> (i32, i32) {
    %c1_i32 = arith.constant 1 : i32
    %0 = arith.muli %arg0, %c1_i32 : i32
    %1 = arith.addi %0, %arg1 : i32
    %c0_i32 = arith.constant 0 : i32
    %2 = arith.minsi %1, %c0_i32 : i32
    %c0_i32_0 = arith.constant 0 : i32
    %c0_i32_1 = arith.constant 0 : i32
    return %2, %c0_i32_0 : i32, i32
  }
  func.func @transform_2(%arg0: i32, %arg1: i32) -> (i32, i32, i32) {
    %c0_i32 = arith.constant 0 : i32
    %c0_i32_0 = arith.constant 0 : i32
    %c0_i32_1 = arith.constant 0 : i32
    return %arg0, %c0_i32, %c0_i32_0 : i32, i32, i32
  }
}

</mosaic_0001>

<llo_original>
// kernel: tpu_custom_call.1
$region0: #{tpu_custom_call.1}
  #allocation0 [shape = 'u32[]', space=smem, size = 0x4, offset = 0x4, fixed_abs, tag = 'smem constant byte address 0x4 - core index']
  #allocation1 [shape = 'u32[144,128]{1,0:T(1,128)}', space=vmem, size = 0x12000, scoped, tag = 'internal scratch']
  %s0 = inlined_call_operand.hbm [shape: f32[8,32], index: 0, kind: input, shape index: {}]
  %s1 = inlined_call_operand.hbm [shape: f32[8,32], index: 1, kind: input, shape index: {}]
  %s2 = inlined_call_operand.hbm [shape: f32[1,8,32], index: 2, kind: output, shape index: {}]
  %s3 = sld [smem:[#allocation0]]
  $region30: #{tpu_custom_call.1} parent=0
    _
  %s5 = ssub.s32 1, %s3
  %s6 = scalar_select 0, %s5, %s3
  $region1: #{tpu_custom_call.1} parent=0
    #allocation2 [shape = 'u8[4096]{0}', space=vmem, size = 0x1000, scoped, tag = 'input window, operand 0, single buffered']
    #allocation3 [shape = 's32[1]{0}', space=sflag, size = 0x4, scoped, tag = 'scoped memory for tpu_custom_call.1']
    #allocation4 [shape = 's32[1]{0}', space=sflag, size = 0x4, scoped, tag = 'scoped memory for tpu_custom_call.1']
    #allocation5 [shape = 'u8[4096]{0}', space=vmem, size = 0x1000, scoped, tag = 'input window, operand 1, single buffered']
    #allocation6 [shape = 's32[1]{0}', space=sflag, size = 0x4, scoped, tag = 'scoped memory for tpu_custom_call.1']
    #allocation7 [shape = 'u8[4096]{0}', space=vmem, size = 0x1000, scoped, tag = 'output window, operand 0, single buffered']
    %7 = vsyncpa [#allocation3], 0
    %8 = vsyncpa [#allocation6], 0
    %9 = vsyncpa [#allocation4], 0
    // Predicated region
    $region2: #{tpu_custom_call.1} parent=1 // pred_check
      _
    $region3: #{tpu_custom_call.1} parent=1 // pred_check_branch
      %11 = sbr.rel (0) target = $region5
    $region4: #{tpu_custom_call.1} parent=1 // pred_region
      %s12 = sadd.s32 0, 0
      %p13 = scmp.lt.s32.totalorder %s12, 0
      %s14 = scalar_select %p13, %s12, 0
      %s16 = ssub.s32 128, 128
      %17 = vsyncadd [#allocation3], %s16
      %s18 = smul.addr %s14, 128
      %s19 = scalar_lea.hbm %s0, %s18
      %s21 = sshll.u32 [#allocation2], 4
      %s22 = int_to_ptr.vmem [resolvable:$true] %s21
      %24 = dma.hbm_to_vmem [thread:$0]  %s19, 128, %s22, [#allocation3]
    $region5: #{tpu_custom_call.1} parent=1 // pred_fallthru
      _
    // Predicated region
    $region6: #{tpu_custom_call.1} parent=1 // pred_check
      _
    $region7: #{tpu_custom_call.1} parent=1 // pred_check_branch
      %26 = sbr.rel (0) target = $region9
    $region8: #{tpu_custom_call.1} parent=1 // pred_region
      %s27 = sadd.s32 0, 0
      %p28 = scmp.lt.s32.totalorder %s27, 0
      %s29 = scalar_select %p28, %s27, 0
      %s31 = ssub.s32 128, 128
      %32 = vsyncadd [#allocation6], %s31
      %s33 = smul.addr %s29, 128
      %s34 = scalar_lea.hbm %s1, %s33
      %s36 = sshll.u32 [#allocation5], 4
      %s37 = int_to_ptr.vmem [resolvable:$true] %s36
      %39 = dma.hbm_to_vmem [thread:$0]  %s34, 128, %s37, [#allocation6]
    $region9: #{tpu_custom_call.1} parent=1 // pred_fallthru
      _
    // Predicated region
    $region10: #{tpu_custom_call.1} parent=1 // pred_check
      _
    $region11: #{tpu_custom_call.1} parent=1 // pred_check_branch
      %41 = sbr.rel (0) target = $region13
    $region12: #{tpu_custom_call.1} parent=1 // pred_region
      %42 = dma.done [#allocation3], 128
    $region13: #{tpu_custom_call.1} parent=1 // pred_fallthru
      _
    // Predicated region
    $region14: #{tpu_custom_call.1} parent=1 // pred_check
      _
    $region15: #{tpu_custom_call.1} parent=1 // pred_check_branch
      %44 = sbr.rel (0) target = $region17
    $region16: #{tpu_custom_call.1} parent=1 // pred_region
      %45 = dma.done [#allocation6], 128
    $region17: #{tpu_custom_call.1} parent=1 // pred_fallthru
      _
    %s46 = sadd.s32 0, 0
    %p47 = scmp.lt.s32.totalorder %s46, 0
    %s48 = scalar_select %p47, %s46, 0
    %s49 = sadd.s32 0, 0
    %p50 = scmp.lt.s32.totalorder %s49, 0
    %s51 = scalar_select %p50, %s49, 0
    %p52 = scmp.eq.s32.totalorder 0, 0
    // Predicated region
    $region18: #{tpu_custom_call.1} parent=1 // pred_check
      %p53 = pneg %p52
    $region19: #{tpu_custom_call.1} parent=1 // pred_check_branch
      %55 = sbr.rel (%p53) target = $region21
    $region20: #{tpu_custom_call.1} parent=1 // pred_region
      %vm56 = vcmask 261120
      %57 = vst.msk [vmem:[#allocation7] sm:$0xff] %vm56, 0.0
    $region21: #{tpu_custom_call.1} parent=1 // pred_fallthru
      _
    %v58 = vld [vmem:[#allocation2] sm:$0xff]
    %v59 = vld [vmem:[#allocation5] sm:$0xff]
    %v60 = vsub.f32 %v58, %v59
    %v61 = vmul.f32 %v60, %v60
    %v62 = vtanh.pop %v58
    %v63 = vmul.f32 %v62, 34.785053
    %v64 = vtanh.pop %v59
    %v65 = vmul.f32 %v64, 34.785053
    %v66 = vsub.f32 %v63, %v65
    %v67 = vmul.f32 %v66, %v66
    %v68 = vlaneseq
    %v69 = vand.u32 %v68, 127
    %vm70 = vcmp.eq.s32.totalorder %v69, 2
    %72 = vset.pattern.permute.xlu0 2
    %73 = vperm.xlu0 %72, %v67
    %v74 = vpop.permute.xlu0 %73
    %v76 = vsel %vm70, %v74, %v61
    %s77 = sadd.s32 0, 0
    %s78 = smul.u32 %s77, 8
    %v79 = vlaneseq
    %v80 = vshrl.u32 %v79, 7
    %v81 = vstv %s78
    %v82 = vadd.s32 %v80, %v81
    %vm83 = vcmp.lt.s32.totalorder %v82, 8
    %v84 = vsel %vm83, 1, 0
    %vm85 = vcmp.eq.s32.totalorder %v84, 1
    %v86 = vsel %vm85, %v76, 0.0
    %v87 = vld [vmem:[#allocation7] sm:$0xff]
    %v88 = vadd.f32 %v87, %v86
    %vm89 = vcmask 261120
    %90 = vst.msk [vmem:[#allocation7] sm:$0xff] %vm89, %v88
    // Predicated region
    $region22: #{tpu_custom_call.1} parent=1 // pred_check
      _
    $region23: #{tpu_custom_call.1} parent=1 // pred_check_branch
      %92 = sbr.rel (0) target = $region25
    $region24: #{tpu_custom_call.1} parent=1 // pred_region
      %s94 = ssub.s32 128, 128
      %95 = vsyncadd [#allocation4], %s94
      %s97 = sshll.u32 [#allocation7], 4
      %s98 = int_to_ptr.vmem [resolvable:$true] %s97
      %100 = dma.vmem_to_hbm [thread:$0]  %s98, 128, %s2, [#allocation4]
    $region25: #{tpu_custom_call.1} parent=1 // pred_fallthru
      _
    // Predicated region
    $region26: #{tpu_custom_call.1} parent=1 // pred_check
      _
    $region27: #{tpu_custom_call.1} parent=1 // pred_check_branch
      %102 = sbr.rel (0) target = $region29
    $region28: #{tpu_custom_call.1} parent=1 // pred_region
      %103 = dma.done [#allocation4], 128
    $region29: #{tpu_custom_call.1} parent=1 // pred_fallthru
      _
    %104 = vsyncpa [#allocation3], 1
    %105 = vsyncpa [#allocation6], 1
    %106 = vsyncpa [#allocation4], 1

</llo_original>
